<compile_context>
chip_gen: v6e
topology: v6e:2x2x1
jax: 0.10.0
libtpu: 0.0.40
codegen_flags: <defaults>
</compile_context>

<pallas_src>
import functools

import jax
import jax.numpy as jnp
from jax.experimental import pallas as pl
from jax.experimental.pallas import tpu as pltpu

_LANE = 128


def _tblock_agg_kernel(feats_ref, mask_ref, surf_ref, out_ref, *, c_surf, c_feat):
    """One (batch, D-chunk, row-chunk) tile: normalize mask, mean/var, concat.

    feats_ref : (S, Dt, C, rt, L)
    mask_ref  : (S, Dt, rt, L)
    surf_ref  : (Dt, Cs, rt, L)
    out_ref   : (Dt, Cs + 2*C, rt, L)
    """
    feats = feats_ref[...].astype(jnp.float32)       # accumulate in f32
    m = mask_ref[...].astype(jnp.float32)

    # inv = 1 / (sum_s mask + 1e-7); normalization is folded into the sums so
    # the (S, Dt, rt, L) weight temporary is never materialized.  Exact
    # reciprocal keeps 1e-5 parity with the f32 reference (kernel is HBM-bound,
    # so this is off the critical path anyway).
    inv = pl.reciprocal(jnp.sum(m, axis=0) + 1e-7, approx=False)     # (Dt, rt, L)
    inv_c = inv[:, None, :, :]                                       # (Dt, 1, rt, L)
    mw = m[:, :, None, :, :]                                         # (S, Dt, 1, rt, L)

    mean = jnp.sum(feats * mw, axis=0) * inv_c                       # (Dt, C, rt, L)
    var = jnp.sum(mw * (feats - mean[None]) ** 2, axis=0) * inv_c    # (Dt, C, rt, L)

    # Channel-plane stores; each slab is a full (rt, L) trailing tile.
    out_ref[:, 0:c_surf] = surf_ref[...].astype(out_ref.dtype)
    out_ref[:, c_surf:c_surf + c_feat] = mean.astype(out_ref.dtype)
    out_ref[:, c_surf + c_feat:] = var.astype(out_ref.dtype)


def tblock_aggregate(unprojected_feats, mask, input_surfaces_feats, *,
                     out_dtype=jnp.float32,
                     block_budget_bytes=4 * 1024 * 1024,
                     vmem_limit_bytes=32 * 1024 * 1024):
    """Pallas implementation of TBlock's aggregation stage.

    Args:
      unprojected_feats:    (B, S, D, C, H, W)  float32 or bfloat16
      mask:                 (B, S, D, 1, H, W)  float32 or bfloat16
      input_surfaces_feats: (B, D, Cs, H, W)    float32 or bfloat16
      out_dtype:            output dtype (float32 default; bfloat16 halves
                            output HBM traffic if the downstream block allows)
    Returns:
      surfaces_feats: (B, D, Cs + 2*C, H, W) out_dtype
    """
    B, S, D, C, H, W = unprojected_feats.shape
    assert mask.shape == (B, S, D, 1, H, W)
    Cs = input_surfaces_feats.shape[2]
    assert input_surfaces_feats.shape == (B, D, Cs, H, W)
    Cout = Cs + 2 * C
    HW = H * W

    feats_isz = jnp.dtype(unprojected_feats.dtype).itemsize
    mask_isz = jnp.dtype(mask.dtype).itemsize
    surf_isz = jnp.dtype(input_surfaces_feats.dtype).itemsize
    out_isz = jnp.dtype(out_dtype).itemsize

    # Spatial layout: fold HW onto (rows, 128) only when it is a pure reshape
    # (HW % 128 == 0, no pre-pad / relayout); otherwise keep the natural (H, W)
    # trailing dims -- full-extent blocks are always legal and need no padding.
    if HW % _LANE == 0:
        fold, rows, lanes = True, HW // _LANE, _LANE
    else:
        fold, rows, lanes = False, H, W

    # dtype-native sublane granularity for row chunking.
    min_isz = min(feats_isz, mask_isz, surf_isz, out_isz)
    gran = {4: 8, 2: 16, 1: 32}[min_isz]

    def block_bytes(d_tile, r_tile):
        px = r_tile * lanes
        return d_tile * px * (S * C * feats_isz + S * mask_isz
                              + Cs * surf_isz + Cout * out_isz)

    # Fold several surfaces (D) into one grid step to amortize the ~0.35 us/step
    # fixed cost: largest divisor of D whose per-step block fits the budget.
    d_tile = 1
    for cand in range(D, 0, -1):
        if D % cand == 0 and block_bytes(cand, rows) <= block_budget_bytes:
            d_tile = cand
            break

    if block_bytes(d_tile, rows) <= block_budget_bytes:
        r_tile = rows                              # full spatial extent per step
    else:
        # Even a single (b, d) pair exceeds the budget: chunk rows.  Pick a tile
        # that nearly divides `rows`, rounded to the sublane granularity; the
        # ragged tail is handled by Pallas block clamping (no pre-padding, and
        # mean/var are purely per-pixel so the tail cannot contaminate results).
        per_row = max(1, block_bytes(1, 1))
        max_rows = max(gran, block_budget_bytes // per_row)
        r_tile = pl.cdiv(rows, pl.cdiv(rows, max_rows))
        r_tile = min(rows, pl.cdiv(r_tile, gran) * gran)
    num_r_blocks = pl.cdiv(rows, r_tile)

    def prep(x, squeeze_axis=None):
        if squeeze_axis is not None:
            x = jnp.squeeze(x, axis=squeeze_axis)
        if fold:
            x = x.reshape(*x.shape[:-2], rows, lanes)   # pure reshape, no copy
        return x

    feats_t = prep(unprojected_feats)          # (B, S, D, C, rows, lanes)
    mask_t = prep(mask, squeeze_axis=3)        # (B, S, D, rows, lanes)
    surf_t = prep(input_surfaces_feats)        # (B, D, Cs, rows, lanes)

    grid = (B, D // d_tile, num_r_blocks)      # all axes independent
    kernel = functools.partial(_tblock_agg_kernel, c_surf=Cs, c_feat=C)

    out = pl.pallas_call(
        kernel,
        out_shape=jax.ShapeDtypeStruct((B, D, Cout, rows, lanes), out_dtype),
        grid_spec=pl.GridSpec(
            grid=grid,
            in_specs=[
                # feats (B, S, D, C, rows, lanes) -> (S, d_tile, C, r_tile, lanes)
                pl.BlockSpec((None, S, d_tile, C, r_tile, lanes),
                             lambda b, d, r: (b, 0, d, 0, r, 0)),
                # mask (B, S, D, rows, lanes) -> (S, d_tile, r_tile, lanes)
                pl.BlockSpec((None, S, d_tile, r_tile, lanes),
                             lambda b, d, r: (b, 0, d, r, 0)),
                # surf (B, D, Cs, rows, lanes) -> (d_tile, Cs, r_tile, lanes)
                pl.BlockSpec((None, d_tile, Cs, r_tile, lanes),
                             lambda b, d, r: (b, d, 0, r, 0)),
            ],
            out_specs=pl.BlockSpec((None, d_tile, Cout, r_tile, lanes),
                                   lambda b, d, r: (b, d, 0, r, 0)),
        ),
        compiler_params=pltpu.CompilerParams(
            dimension_semantics=("parallel", "parallel", "parallel"),
            vmem_limit_bytes=vmem_limit_bytes),
    )(feats_t, mask_t, surf_t)

    if fold:
        out = out.reshape(B, D, Cout, H, W)    # pure reshape, no slice/pad pass
    return out


def tblock_aggregate_ref(unprojected_feats, mask, input_surfaces_feats):
    """Pure-JAX reference mirroring the PyTorch semantics (f32 math)."""
    unprojected_feats = unprojected_feats.astype(jnp.float32)
    mask = mask.astype(jnp.float32)
    input_surfaces_feats = input_surfaces_feats.astype(jnp.float32)
    weight = mask / (jnp.sum(mask, axis=1, keepdims=True) + 1e-7)
    mean = jnp.sum(unprojected_feats * weight, axis=1, keepdims=True)
    var = jnp.sum(weight * (unprojected_feats - mean) ** 2, axis=1, keepdims=True)
    mean_var = jnp.concatenate([mean, var], axis=3)[:, 0]  # (B, D, 2C, H, W)
    return jnp.concatenate([input_surfaces_feats, mean_var], axis=2)


if __name__ == "__main__":
    key = jax.random.PRNGKey(0)
    k1, k2, k3 = jax.random.split(key, 3)

    # Small shapes consistent with the module:
    #   batch=2, n_source=3, num_surfaces=4, input_size(C)=3,
    #   input_surfaces_feats_size(Cs)=3, H=W=16
    B, S, D, C, Cs, H, W = 2, 3, 4, 3, 3, 16, 16

    feats = jax.random.normal(k1, (B, S, D, C, H, W), jnp.float32)
    mask = (jax.random.uniform(k2, (B, S, D, 1, H, W)) > 0.3).astype(jnp.float32)
    surf = jax.random.normal(k3, (B, D, Cs, H, W), jnp.float32)

    # f32 path (HW=256 folds onto lanes, all 4 surfaces in one grid step).
    out = jax.block_until_ready(tblock_aggregate(feats, mask, surf))
    ref = tblock_aggregate_ref(feats, mask, surf)
    assert out.shape == (B, D, Cs + 2 * C, H, W)
    assert jnp.allclose(out, ref, atol=1e-5, rtol=1e-5)

    # Ragged spatial extent (HW % 128 != 0): natural (H, W) layout, no pre-pad.
    Hr = Wr = 12
    feats_r = jax.random.normal(k1, (B, S, D, C, Hr, Wr), jnp.float32)
    mask_r = (jax.random.uniform(k2, (B, S, D, 1, Hr, Wr)) > 0.3).astype(jnp.float32)
    surf_r = jax.random.normal(k3, (B, D, Cs, Hr, Wr), jnp.float32)
    out_r = jax.block_until_ready(tblock_aggregate(feats_r, mask_r, surf_r))
    ref_r = tblock_aggregate_ref(feats_r, mask_r, surf_r)
    assert out_r.shape == (B, D, Cs + 2 * C, Hr, Wr)
    assert jnp.allclose(out_r, ref_r, atol=1e-5, rtol=1e-5)

    # bf16 inputs (halves feats/mask HBM traffic); f32 accumulation + output.
    feats_bf, mask_bf = feats.astype(jnp.bfloat16), mask.astype(jnp.bfloat16)
    out_bf = jax.block_until_ready(tblock_aggregate(feats_bf, mask_bf, surf))
    ref_bf = tblock_aggregate_ref(feats_bf, mask_bf, surf)
    assert jnp.allclose(out_bf, ref_bf, atol=1e-4, rtol=1e-4)

    # Optional bf16 output (downstream block permitting): ~halves output traffic.
    out_bf16o = jax.block_until_ready(
        tblock_aggregate(feats_bf, mask_bf, surf, out_dtype=jnp.bfloat16))
    assert out_bf16o.dtype == jnp.bfloat16
    assert jnp.allclose(out_bf16o.astype(jnp.float32), ref_bf, atol=5e-2, rtol=5e-2)

    print("KERNEL_OK")
</pallas_src>

<mosaic_0001>
module attributes {stable_mosaic.version = 11 : i64} {
  func.func @_tblock_agg_kernel(%arg0: i32, %arg1: i32, %arg2: i32, %arg3: memref<1x3x4x3x2x128xf32, #tpu.memory_space<vmem>>, %arg4: memref<1x3x4x2x128xf32, #tpu.memory_space<vmem>>, %arg5: memref<1x4x3x2x128xf32, #tpu.memory_space<vmem>>, %arg6: memref<1x4x9x2x128xf32, #tpu.memory_space<vmem>>) attributes {dimension_semantics = [#tpu.dimension_semantics<parallel>, #tpu.dimension_semantics<parallel>, #tpu.dimension_semantics<parallel>], iteration_bounds = array<i64: 2, 1, 1>, scalar_prefetch = 0 : i64, scratch_operands = 0 : i64, tpu.core_type = #tpu.core_type<tc>, window_params = [{transform_indices = @transform_0, window_bounds = array<i64: 1, 3, 4, 3, 2, 128>}, {transform_indices = @transform_1, window_bounds = array<i64: 1, 3, 4, 2, 128>}, {transform_indices = @transform_2, window_bounds = array<i64: 1, 4, 3, 2, 128>}, {transform_indices = @transform_3, window_bounds = array<i64: 1, 4, 9, 2, 128>}]} {
    %c0 = arith.constant 0 : index
    %c0_0 = arith.constant 0 : index
    %c0_1 = arith.constant 0 : index
    %c0_2 = arith.constant 0 : index
    %c0_3 = arith.constant 0 : index
    %c0_4 = arith.constant 0 : index
    %0 = vector.load %arg3[%c0, %c0_0, %c0_1, %c0_2, %c0_3, %c0_4] : memref<1x3x4x3x2x128xf32, #tpu.memory_space<vmem>>, vector<1x3x4x3x2x128xf32>
    %1 = vector.shape_cast %0 : vector<1x3x4x3x2x128xf32> to vector<3x4x3x2x128xf32>
    %c0_5 = arith.constant 0 : index
    %c0_6 = arith.constant 0 : index
    %c0_7 = arith.constant 0 : index
    %c0_8 = arith.constant 0 : index
    %c0_9 = arith.constant 0 : index
    %2 = vector.load %arg4[%c0_5, %c0_6, %c0_7, %c0_8, %c0_9] : memref<1x3x4x2x128xf32, #tpu.memory_space<vmem>>, vector<1x3x4x2x128xf32>
    %3 = vector.shape_cast %2 : vector<1x3x4x2x128xf32> to vector<3x4x2x128xf32>
    %cst = arith.constant dense<0.000000e+00> : vector<4x2x128xf32>
    %4 = vector.multi_reduction <add>, %3, %cst [0] : vector<3x4x2x128xf32> to vector<4x2x128xf32>
    %cst_10 = arith.constant 1.000000e-07 : f32
    %5 = vector.broadcast %cst_10 : f32 to vector<4x2x128xf32>
    %6 = arith.addf %4, %5 : vector<4x2x128xf32>
    %7 = tpu.reciprocal %6 : vector<4x2x128xf32> -> vector<4x2x128xf32>
    %8 = vector.shape_cast %7 : vector<4x2x128xf32> to vector<4x1x2x128xf32>
    %9 = vector.shape_cast %3 : vector<3x4x2x128xf32> to vector<3x4x1x2x128xf32>
    %10 = vector.broadcast %9 : vector<3x4x1x2x128xf32> to vector<3x4x3x2x128xf32>
    %11 = arith.mulf %1, %10 : vector<3x4x3x2x128xf32>
    %cst_11 = arith.constant dense<0.000000e+00> : vector<4x3x2x128xf32>
    %12 = vector.multi_reduction <add>, %11, %cst_11 [0] : vector<3x4x3x2x128xf32> to vector<4x3x2x128xf32>
    %13 = vector.broadcast %8 : vector<4x1x2x128xf32> to vector<4x3x2x128xf32>
    %14 = arith.mulf %12, %13 : vector<4x3x2x128xf32>
    %15 = vector.shape_cast %14 : vector<4x3x2x128xf32> to vector<1x4x3x2x128xf32>
    %16 = vector.broadcast %15 : vector<1x4x3x2x128xf32> to vector<3x4x3x2x128xf32>
    %17 = arith.subf %1, %16 : vector<3x4x3x2x128xf32>
    %18 = arith.mulf %17, %17 : vector<3x4x3x2x128xf32>
    %19 = vector.broadcast %9 : vector<3x4x1x2x128xf32> to vector<3x4x3x2x128xf32>
    %20 = arith.mulf %19, %18 : vector<3x4x3x2x128xf32>
    %cst_12 = arith.constant dense<0.000000e+00> : vector<4x3x2x128xf32>
    %21 = vector.multi_reduction <add>, %20, %cst_12 [0] : vector<3x4x3x2x128xf32> to vector<4x3x2x128xf32>
    %22 = vector.broadcast %8 : vector<4x1x2x128xf32> to vector<4x3x2x128xf32>
    %23 = arith.mulf %21, %22 : vector<4x3x2x128xf32>
    %c0_13 = arith.constant 0 : index
    %c0_14 = arith.constant 0 : index
    %c0_15 = arith.constant 0 : index
    %c0_16 = arith.constant 0 : index
    %c0_17 = arith.constant 0 : index
    %24 = vector.load %arg5[%c0_13, %c0_14, %c0_15, %c0_16, %c0_17] : memref<1x4x3x2x128xf32, #tpu.memory_space<vmem>>, vector<1x4x3x2x128xf32>
    %25 = vector.shape_cast %24 : vector<1x4x3x2x128xf32> to vector<4x3x2x128xf32>
    %c0_18 = arith.constant 0 : index
    %c0_19 = arith.constant 0 : index
    %c0_20 = arith.constant 0 : index
    %c0_21 = arith.constant 0 : index
    %c0_22 = arith.constant 0 : index
    %26 = vector.load %arg6[%c0_18, %c0_19, %c0_20, %c0_21, %c0_22] : memref<1x4x9x2x128xf32, #tpu.memory_space<vmem>>, vector<1x4x3x2x128xf32>
    %27 = vector.shape_cast %26 : vector<1x4x3x2x128xf32> to vector<4x3x2x128xf32>
    %28 = vector.shape_cast %25 : vector<4x3x2x128xf32> to vector<1x4x3x2x128xf32>
    tpu.vector_store %arg6[%c0_18, %c0_19, %c0_20, %c0_21, %c0_22], %28 {strides = array<i32>} : memref<1x4x9x2x128xf32, #tpu.memory_space<vmem>>, vector<1x4x3x2x128xf32>,
    %c0_23 = arith.constant 0 : index
    %c0_24 = arith.constant 0 : index
    %c3 = arith.constant 3 : index
    %c0_25 = arith.constant 0 : index
    %c0_26 = arith.constant 0 : index
    %29 = vector.load %arg6[%c0_23, %c0_24, %c3, %c0_25, %c0_26] : memref<1x4x9x2x128xf32, #tpu.memory_space<vmem>>, vector<1x4x3x2x128xf32>
    %30 = vector.shape_cast %29 : vector<1x4x3x2x128xf32> to vector<4x3x2x128xf32>
    %31 = vector.shape_cast %14 : vector<4x3x2x128xf32> to vector<1x4x3x2x128xf32>
    tpu.vector_store %arg6[%c0_23, %c0_24, %c3, %c0_25, %c0_26], %31 {strides = array<i32>} : memref<1x4x9x2x128xf32, #tpu.memory_space<vmem>>, vector<1x4x3x2x128xf32>,
    %c0_27 = arith.constant 0 : index
    %c0_28 = arith.constant 0 : index
    %c6 = arith.constant 6 : index
    %c0_29 = arith.constant 0 : index
    %c0_30 = arith.constant 0 : index
    %32 = vector.load %arg6[%c0_27, %c0_28, %c6, %c0_29, %c0_30] : memref<1x4x9x2x128xf32, #tpu.memory_space<vmem>>, vector<1x4x3x2x128xf32>
    %33 = vector.shape_cast %32 : vector<1x4x3x2x128xf32> to vector<4x3x2x128xf32>
    %34 = vector.shape_cast %23 : vector<4x3x2x128xf32> to vector<1x4x3x2x128xf32>
    tpu.vector_store %arg6[%c0_27, %c0_28, %c6, %c0_29, %c0_30], %34 {strides = array<i32>} : memref<1x4x9x2x128xf32, #tpu.memory_space<vmem>>, vector<1x4x3x2x128xf32>,
    return
  }
  func.func @transform_0(%arg0: i32, %arg1: i32, %arg2: i32) -> (i32, i32, i32, i32, i32, i32) {
    %c0_i32 = arith.constant 0 : i32
    %c0_i32_0 = arith.constant 0 : i32
    %c0_i32_1 = arith.constant 0 : i32
    %c0_i32_2 = arith.constant 0 : i32
    return %arg0, %c0_i32, %arg1, %c0_i32_0, %arg2, %c0_i32_1 : i32, i32, i32, i32, i32, i32
  }
  func.func @transform_1(%arg0: i32, %arg1: i32, %arg2: i32) -> (i32, i32, i32, i32, i32) {
    %c0_i32 = arith.constant 0 : i32
    %c0_i32_0 = arith.constant 0 : i32
    %c0_i32_1 = arith.constant 0 : i32
    return %arg0, %c0_i32, %arg1, %arg2, %c0_i32_0 : i32, i32, i32, i32, i32
  }
  func.func @transform_2(%arg0: i32, %arg1: i32, %arg2: i32) -> (i32, i32, i32, i32, i32) {
    %c0_i32 = arith.constant 0 : i32
    %c0_i32_0 = arith.constant 0 : i32
    %c0_i32_1 = arith.constant 0 : i32
    return %arg0, %arg1, %c0_i32, %arg2, %c0_i32_0 : i32, i32, i32, i32, i32
  }
  func.func @transform_3(%arg0: i32, %arg1: i32, %arg2: i32) -> (i32, i32, i32, i32, i32) {
    %c0_i32 = arith.constant 0 : i32
    %c0_i32_0 = arith.constant 0 : i32
    %c0_i32_1 = arith.constant 0 : i32
    return %arg0, %arg1, %c0_i32, %arg2, %c0_i32_0 : i32, i32, i32, i32, i32
  }
}

</mosaic_0001>

<llo_original>
// kernel: tpu_custom_call.1
$region0: #{tpu_custom_call.1}
  #allocation0 [shape = 'u32[]', space=smem, size = 0x4, offset = 0x4, fixed_abs, tag = 'smem constant byte address 0x4 - core index']
  #allocation1 [shape = 'u32[144,128]{1,0:T(1,128)}', space=vmem, size = 0x12000, scoped, tag = 'internal scratch']
  %s0 = inlined_call_operand.hbm [shape: f32[2,3,4,3,2,128], index: 0, kind: input, shape index: {}]
  %s1 = inlined_call_operand.hbm [shape: f32[2,3,4,2,128], index: 1, kind: input, shape index: {}]
  %s2 = inlined_call_operand.hbm [shape: f32[2,4,3,2,128], index: 2, kind: input, shape index: {}]
  %s3 = inlined_call_operand.hbm [shape: f32[2,4,9,2,128], index: 3, kind: output, shape index: {}]
  %s4 = sld [smem:[#allocation0]]
  $region57: #{tpu_custom_call.1} parent=0
    _
  %s6 = ssub.s32 1, %s4
  %s7 = scalar_select 0, %s6, %s4
  $region1: #{tpu_custom_call.1} parent=0
    #allocation2 [shape = 'u8[73728]{0}', space=vmem, size = 0x12000, scoped, tag = 'input window, operand 0']
    #allocation3 [shape = 's32[2]{0}', space=sflag, size = 0x8, scoped, tag = 'scoped memory for tpu_custom_call.1']
    #allocation4 [shape = 's32[2]{0}', space=sflag, size = 0x8, scoped, tag = 'scoped memory for tpu_custom_call.1']
    #allocation5 [shape = 'u8[24576]{0}', space=vmem, size = 0x6000, scoped, tag = 'input window, operand 1']
    #allocation6 [shape = 's32[2]{0}', space=sflag, size = 0x8, scoped, tag = 'scoped memory for tpu_custom_call.1']
    #allocation7 [shape = 'u8[24576]{0}', space=vmem, size = 0x6000, scoped, tag = 'input window, operand 2']
    #allocation8 [shape = 'u8[73728]{0}', space=vmem, size = 0x12000, scoped, tag = 'output window, operand 0']
    %8 = vsyncpa [#allocation3], 0
    %s9 = scalar_lea.sflag [#allocation3], 1
    %10 = vsyncpa %s9, 0
    %11 = vsyncpa [#allocation6], 0
    %s12 = scalar_lea.sflag [#allocation6], 1
    %13 = vsyncpa %s12, 0
    %14 = vsyncpa [#allocation4], 0
    %s15 = scalar_lea.sflag [#allocation4], 1
    %16 = vsyncpa %s15, 0
    loop: start=0, step=1, limit=4
    $region2: #{tpu_custom_call.1} parent=1 // loop_pre_header
      _
    $region3: #{tpu_custom_call.1} parent=1 // loop_header
      %s18 = sphi 0, %s22
      %p19 = scmp.ge.s32.totalorder %s18, 4
      %s25 = sphi 0, %s44
      %s26 = sphi 0, %s40
      %s27 = sphi 0, %s36
      %s28 = sphi 0, %s25
      %s29 = sphi 0, %s26
      %s30 = sphi 0, %s27
      %s31 = sphi 0, %s28
      %s32 = sphi 0, %s29
      %s33 = sphi 0, %s30
      %s51 = sphi 0, %s53
      %s54 = sphi 0, %s51
      %s55 = sphi 0, %s54
      %s71 = sphi 0, %s55
      %s81 = sphi 0, %s83
      %s84 = sphi 0, %s81
      %s85 = sphi 0, %s84
      %s101 = sphi 0, %s85
      %s111 = sphi 0, %s113
      %s114 = sphi 0, %s111
      %s115 = sphi 0, %s114
      %s131 = sphi 0, %s115
      %s141 = sphi 0, %s143
      %s144 = sphi 0, %s141
      %s145 = sphi 0, %s144
      %s161 = sphi 0, %s145
    $region4: #{tpu_custom_call.1} parent=1 // loop_header_branch
      %21 = sbr.rel (%p19) target = $region8
    $region5: #{tpu_custom_call.1} parent=1 // loop_body
      %s23 = ssub.s32 %s18, 1
      %s24 = ssub.s32 %s18, 2
      %s34 = sadd.s32 1, %s27
      %p35 = scmp.ge.s32.totalorder %s34, 1
      %s36 = scalar_select %p35, 0, %s34
      %s37 = sadd.s32 1, %s26
      %s38 = scalar_select %p35, %s37, %s26
      %p39 = scmp.ge.s32.totalorder %s38, 1
      %s40 = scalar_select %p39, 0, %s38
      %s41 = sadd.s32 1, %s25
      %s42 = scalar_select %p39, %s41, %s25
      %p43 = scmp.ge.s32.totalorder %s42, 2
      %s44 = scalar_select %p43, 0, %s42
      %s45 = ssub.s32 %s25, %s44
      %s46 = ssub.s32 %s26, %s40
      %s47 = sor.u32 %s45, %s46
      %s48 = ssub.s32 %s27, %s36
      %s49 = sor.u32 %s47, %s48
      %p50 = scmp.eq.s32.totalorder %s49, 0
      %s52 = sadd.s32 %s51, 1
      %s53 = scalar_select %p50, %s51, %s52
      %p56 = pneg %p50
      %p57 = scmp.eq.s32.totalorder %s18, 1
      %p58 = por %p56, %p57
      %p59 = scmp.ne.s32.totalorder %s51, %s54
      %p60 = scmp.eq.s32.totalorder %s18, 0
      %p61 = por %p59, %p60
      %p62 = scmp.ne.s32.totalorder %s51, %s54
      %p63 = scmp.eq.s32.totalorder %s23, 1
      %p64 = por %p62, %p63
      %p65 = scmp.ne.s32.totalorder %s54, %s55
      %p66 = scmp.eq.s32.totalorder %s23, 0
      %p67 = por %p65, %p66
      %p68 = scmp.ne.s32.totalorder %s54, %s55
      %p69 = scmp.eq.s32.totalorder %s24, 1
      %p70 = por %p68, %p69
      %p72 = scmp.ne.s32.totalorder %s55, %s71
      %p73 = scmp.eq.s32.totalorder %s24, 0
      %p74 = por %p72, %p73
      %s75 = ssub.s32 %s25, %s44
      %s76 = ssub.s32 %s26, %s40
      %s77 = sor.u32 %s75, %s76
      %s78 = ssub.s32 %s27, %s36
      %s79 = sor.u32 %s77, %s78
      %p80 = scmp.eq.s32.totalorder %s79, 0
      %s82 = sadd.s32 %s81, 1
      %s83 = scalar_select %p80, %s81, %s82
      %p86 = pneg %p80
      %p87 = scmp.eq.s32.totalorder %s18, 1
      %p88 = por %p86, %p87
      %p89 = scmp.ne.s32.totalorder %s81, %s84
      %p90 = scmp.eq.s32.totalorder %s18, 0
      %p91 = por %p89, %p90
      %p92 = scmp.ne.s32.totalorder %s81, %s84
      %p93 = scmp.eq.s32.totalorder %s23, 1
      %p94 = por %p92, %p93
      %p95 = scmp.ne.s32.totalorder %s84, %s85
      %p96 = scmp.eq.s32.totalorder %s23, 0
      %p97 = por %p95, %p96
      %p98 = scmp.ne.s32.totalorder %s84, %s85
      %p99 = scmp.eq.s32.totalorder %s24, 1
      %p100 = por %p98, %p99
      %p102 = scmp.ne.s32.totalorder %s85, %s101
      %p103 = scmp.eq.s32.totalorder %s24, 0
      %p104 = por %p102, %p103
      %s105 = ssub.s32 %s25, %s44
      %s106 = ssub.s32 %s26, %s40
      %s107 = sor.u32 %s105, %s106
      %s108 = ssub.s32 %s27, %s36
      %s109 = sor.u32 %s107, %s108
      %p110 = scmp.eq.s32.totalorder %s109, 0
      %s112 = sadd.s32 %s111, 1
      %s113 = scalar_select %p110, %s111, %s112
      %p116 = pneg %p110
      %p117 = scmp.eq.s32.totalorder %s18, 1
      %p118 = por %p116, %p117
      %p119 = scmp.ne.s32.totalorder %s111, %s114
      %p120 = scmp.eq.s32.totalorder %s18, 0
      %p121 = por %p119, %p120
      %p122 = scmp.ne.s32.totalorder %s111, %s114
      %p123 = scmp.eq.s32.totalorder %s23, 1
      %p124 = por %p122, %p123
      %p125 = scmp.ne.s32.totalorder %s114, %s115
      %p126 = scmp.eq.s32.totalorder %s23, 0
      %p127 = por %p125, %p126
      %p128 = scmp.ne.s32.totalorder %s114, %s115
      %p129 = scmp.eq.s32.totalorder %s24, 1
      %p130 = por %p128, %p129
      %p132 = scmp.ne.s32.totalorder %s115, %s131
      %p133 = scmp.eq.s32.totalorder %s24, 0
      %p134 = por %p132, %p133
      %s135 = ssub.s32 %s25, %s44
      %s136 = ssub.s32 %s26, %s40
      %s137 = sor.u32 %s135, %s136
      %s138 = ssub.s32 %s27, %s36
      %s139 = sor.u32 %s137, %s138
      %p140 = scmp.eq.s32.totalorder %s139, 0
      %s142 = sadd.s32 %s141, 1
      %s143 = scalar_select %p140, %s141, %s142
      %p146 = pneg %p140
      %p147 = scmp.eq.s32.totalorder %s18, 1
      %p148 = por %p146, %p147
      %p149 = scmp.ne.s32.totalorder %s141, %s144
      %p150 = scmp.eq.s32.totalorder %s18, 0
      %p151 = por %p149, %p150
      %p152 = scmp.ne.s32.totalorder %s141, %s144
      %p153 = scmp.eq.s32.totalorder %s23, 1
      %p154 = por %p152, %p153
      %p155 = scmp.ne.s32.totalorder %s144, %s145
      %p156 = scmp.eq.s32.totalorder %s23, 0
      %p157 = por %p155, %p156
      %p158 = scmp.ne.s32.totalorder %s144, %s145
      %p159 = scmp.eq.s32.totalorder %s24, 1
      %p160 = por %p158, %p159
      %p162 = scmp.ne.s32.totalorder %s145, %s161
      %p163 = scmp.eq.s32.totalorder %s24, 0
      %p164 = por %p162, %p163
      %p165 = scmp.le.s32.totalorder 1, %s18
      %p166 = scmp.lt.s32.totalorder %s18, 3
      %p167 = pnand %p165, %p166
      %p168 = pneg %p167
      // Predicated region
      $region9: #{tpu_custom_call.1} parent=5 // pred_check
        _
      $region10: #{tpu_custom_call.1} parent=5 // pred_check_branch
        %170 = sbr.rel (%p167) target = $region12
      $region11: #{tpu_custom_call.1} parent=5 // pred_region
        %s171 = ssub.s32 %s18, 1
      $region12: #{tpu_custom_call.1} parent=5 // pred_fallthru
        _
      %p172 = scmp.lt.s32.totalorder %s18, 2
      // Predicated region
      $region13: #{tpu_custom_call.1} parent=5 // pred_check
        %p173 = pneg %p172
      $region14: #{tpu_custom_call.1} parent=5 // pred_check_branch
        %175 = sbr.rel (%p173) target = $region16
      $region15: #{tpu_custom_call.1} parent=5 // pred_region
        // Predicated region
        $region17: #{tpu_custom_call.1} parent=15 // pred_check
          %p176 = pneg %p61
        $region18: #{tpu_custom_call.1} parent=15 // pred_check_branch
          %178 = sbr.rel (%p176) target = $region20
        $region19: #{tpu_custom_call.1} parent=15 // pred_region
          %s179 = sand.u32 %s51, 1
          %s180 = scalar_lea.sflag [#allocation3], %s179
          %s181 = sand.u32 %s51, 1
          %s182 = smul.addr %s181, 72
          %s183 = scalar_lea.vmem [#allocation2], %s182
          %s184 = smul.u32 4, %s26
          %s186 = ssub.s32 1152, 1152
          %187 = vsyncadd %s180, %s186
          %s188 = smul.addr %s184, 3
          %s189 = sadd.s32 %s27, %s188
          %s190 = smul.addr %s25, 36
          %s191 = sadd.s32 %s189, %s190
          %s192 = smul.addr %s191, 32
          %s193 = scalar_lea.hbm %s0, %s192
          %s194 = sshll.u32 %s183, 4
          %s195 = int_to_ptr.vmem [resolvable:$true] %s194
          %200 = dma.hbm_to_vmem [thread:$0]  %s193, 1152, %s195, %s180, 32, 32, 2
        $region20: #{tpu_custom_call.1} parent=15 // pred_fallthru
          _
        // Predicated region
        $region21: #{tpu_custom_call.1} parent=15 // pred_check
          %p201 = pneg %p91
        $region22: #{tpu_custom_call.1} parent=15 // pred_check_branch
          %203 = sbr.rel (%p201) target = $region24
        $region23: #{tpu_custom_call.1} parent=15 // pred_region
          %s204 = sand.u32 %s18, 1
          %s205 = scalar_lea.sflag [#allocation6], %s204
          %s206 = sand.u32 %s81, 1
          %s207 = smul.addr %s206, 24
          %s208 = scalar_lea.vmem [#allocation5], %s207
          %s209 = smul.u32 4, %s26
          %s211 = ssub.s32 384, 384
          %212 = vsyncadd %s205, %s211
          %s213 = sadd.s32 %s27, %s209
          %s214 = smul.addr %s25, 12
          %s215 = sadd.s32 %s213, %s214
          %s216 = smul.addr %s215, 32
          %s217 = scalar_lea.hbm %s1, %s216
          %s218 = sshll.u32 %s208, 4
          %s219 = int_to_ptr.vmem [resolvable:$true] %s218
          %224 = dma.hbm_to_vmem [thread:$0]  %s217, 384, %s219, %s205, 32, 32, 2
        $region24: #{tpu_custom_call.1} parent=15 // pred_fallthru
          _
        // Predicated region
        $region25: #{tpu_custom_call.1} parent=15 // pred_check
          %p225 = pneg %p121
        $region26: #{tpu_custom_call.1} parent=15 // pred_check_branch
          %227 = sbr.rel (%p225) target = $region28
        $region27: #{tpu_custom_call.1} parent=15 // pred_region
          %s228 = sand.u32 %s18, 1
          %s229 = scalar_lea.sflag [#allocation6], %s228
          %s230 = sand.u32 %s111, 1
          %s231 = smul.addr %s230, 24
          %s232 = scalar_lea.vmem [#allocation7], %s231
          %s233 = smul.u32 4, %s26
          %s235 = ssub.s32 384, 384
          %236 = vsyncadd %s229, %s235
          %s237 = smul.addr %s233, 3
          %s238 = sadd.s32 %s27, %s237
          %s239 = smul.addr %s25, 12
          %s240 = sadd.s32 %s238, %s239
          %s241 = smul.addr %s240, 32
          %s242 = scalar_lea.hbm %s2, %s241
          %s243 = sshll.u32 %s232, 4
          %s244 = int_to_ptr.vmem [resolvable:$true] %s243
          %249 = dma.hbm_to_vmem [thread:$0]  %s242, 384, %s244, %s229, 32, 32, 2
        $region28: #{tpu_custom_call.1} parent=15 // pred_fallthru
          _
      $region16: #{tpu_custom_call.1} parent=5 // pred_fallthru
        _
      %p250 = scmp.le.s32.totalorder 1, %s18
      %p251 = scmp.lt.s32.totalorder %s18, 3
      %p252 = pnand %p250, %p251
      %p253 = pneg %p252
      // Predicated region
      $region29: #{tpu_custom_call.1} parent=5 // pred_check
        _
      $region30: #{tpu_custom_call.1} parent=5 // pred_check_branch
        %255 = sbr.rel (%p252) target = $region32
      $region31: #{tpu_custom_call.1} parent=5 // pred_region
        %s256 = ssub.s32 %s18, 1
        %s257 = sand.u32 %s54, 1
        %s258 = scalar_lea.sflag [#allocation3], %s257
        %s259 = sand.u32 %s54, 1
        %s260 = smul.addr %s259, 72
        %s261 = scalar_lea.vmem [#allocation2], %s260
        // Predicated region
        $region33: #{tpu_custom_call.1} parent=31 // pred_check
          %p262 = pneg %p67
        $region34: #{tpu_custom_call.1} parent=31 // pred_check_branch
          %264 = sbr.rel (%p262) target = $region36
        $region35: #{tpu_custom_call.1} parent=31 // pred_region
          %265 = dma.done %s258, 1152
        $region36: #{tpu_custom_call.1} parent=31 // pred_fallthru
          _
        %s266 = sand.u32 %s23, 1
        %s267 = scalar_lea.sflag [#allocation6], %s266
        %s268 = sand.u32 %s84, 1
        %s269 = smul.addr %s268, 24
        %s270 = scalar_lea.vmem [#allocation5], %s269
        // Predicated region
        $region37: #{tpu_custom_call.1} parent=31 // pred_check
          %p271 = pneg %p97
        $region38: #{tpu_custom_call.1} parent=31 // pred_check_branch
          %273 = sbr.rel (%p271) target = $region40
        $region39: #{tpu_custom_call.1} parent=31 // pred_region
          %274 = dma.done %s267, 384
        $region40: #{tpu_custom_call.1} parent=31 // pred_fallthru
          _
        %s275 = sand.u32 %s23, 1
        %s276 = scalar_lea.sflag [#allocation6], %s275
        %s277 = sand.u32 %s114, 1
        %s278 = smul.addr %s277, 24
        %s279 = scalar_lea.vmem [#allocation7], %s278
        // Predicated region
        $region41: #{tpu_custom_call.1} parent=31 // pred_check
          %p280 = pneg %p127
        $region42: #{tpu_custom_call.1} parent=31 // pred_check_branch
          %282 = sbr.rel (%p280) target = $region44
        $region43: #{tpu_custom_call.1} parent=31 // pred_region
          %283 = dma.done %s276, 384
        $region44: #{tpu_custom_call.1} parent=31 // pred_fallthru
          _
        %s284 = sand.u32 %s54, 1
        %s285 = scalar_lea.sflag [#allocation3], %s284
        %s286 = sand.u32 %s54, 1
        %s287 = smul.addr %s286, 72
        %s288 = scalar_lea.vmem [#allocation2], %s287
        %p289 = pneg %p67
        %p290 = pneg %p64
        %s291 = sand.u32 %s23, 1
        %s292 = scalar_lea.sflag [#allocation6], %s291
        %s293 = sand.u32 %s84, 1
        %s294 = smul.addr %s293, 24
        %s295 = scalar_lea.vmem [#allocation5], %s294
        %p296 = pneg %p97
        %p297 = pneg %p94
        %s298 = sand.u32 %s23, 1
        %s299 = scalar_lea.sflag [#allocation6], %s298
        %s300 = sand.u32 %s114, 1
        %s301 = smul.addr %s300, 24
        %s302 = scalar_lea.vmem [#allocation7], %s301
        %p303 = pneg %p127
        %p304 = pneg %p124
        %p305 = pneg %p157
        %p306 = pneg %p154
        %s307 = sand.u32 %s144, 1
        %s308 = scalar_lea.sflag [#allocation4], %s307
        %s309 = sand.u32 %s144, 1
        %s310 = smul.addr %s309, 72
        %s311 = scalar_lea.vmem [#allocation8], %s310
        %s312 = smul.u32 4, %s29
        %s313 = smul.u32 4, %s29
        %s314 = smul.u32 4, %s29
        %s315 = smul.u32 4, %s29
        %v316 = vld [vmem:[%s261] sm:$0x3]
        %v317 = vld [vmem:[%s261 + $0x2] sm:$0x3]
        %v318 = vld [vmem:[%s261 + $0x4] sm:$0x3]
        %v319 = vld [vmem:[%s261 + $0x6] sm:$0x3]
        %v320 = vld [vmem:[%s261 + $0x8] sm:$0x3]
        %v321 = vld [vmem:[%s261 + $0xa] sm:$0x3]
        %v322 = vld [vmem:[%s261 + $0xc] sm:$0x3]
        %v323 = vld [vmem:[%s261 + $0xe] sm:$0x3]
        %v324 = vld [vmem:[%s261 + $0x10] sm:$0x3]
        %v325 = vld [vmem:[%s261 + $0x12] sm:$0x3]
        %v326 = vld [vmem:[%s261 + $0x14] sm:$0x3]
        %v327 = vld [vmem:[%s261 + $0x16] sm:$0x3]
        %v328 = vld [vmem:[%s261 + $0x18] sm:$0x3]
        %v329 = vld [vmem:[%s261 + $0x1a] sm:$0x3]
        %v330 = vld [vmem:[%s261 + $0x1c] sm:$0x3]
        %v331 = vld [vmem:[%s261 + $0x1e] sm:$0x3]
        %v332 = vld [vmem:[%s261 + $0x20] sm:$0x3]
        %v333 = vld [vmem:[%s261 + $0x22] sm:$0x3]
        %v334 = vld [vmem:[%s261 + $0x24] sm:$0x3]
        %v335 = vld [vmem:[%s261 + $0x26] sm:$0x3]
        %v336 = vld [vmem:[%s261 + $0x28] sm:$0x3]
        %v337 = vld [vmem:[%s261 + $0x2a] sm:$0x3]
        %v338 = vld [vmem:[%s261 + $0x2c] sm:$0x3]
        %v339 = vld [vmem:[%s261 + $0x2e] sm:$0x3]
        %v340 = vld [vmem:[%s261 + $0x30] sm:$0x3]
        %v341 = vld [vmem:[%s261 + $0x32] sm:$0x3]
        %v342 = vld [vmem:[%s261 + $0x34] sm:$0x3]
        %v343 = vld [vmem:[%s261 + $0x36] sm:$0x3]
        %v344 = vld [vmem:[%s261 + $0x38] sm:$0x3]
        %v345 = vld [vmem:[%s261 + $0x3a] sm:$0x3]
        %v346 = vld [vmem:[%s261 + $0x3c] sm:$0x3]
        %v347 = vld [vmem:[%s261 + $0x3e] sm:$0x3]
        %v348 = vld [vmem:[%s261 + $0x40] sm:$0x3]
        %v349 = vld [vmem:[%s261 + $0x42] sm:$0x3]
        %v350 = vld [vmem:[%s261 + $0x44] sm:$0x3]
        %v351 = vld [vmem:[%s261 + $0x46] sm:$0x3]
        %v352 = vld [vmem:[%s270] sm:$0x3]
        %v353 = vld [vmem:[%s270 + $0x2] sm:$0x3]
        %v354 = vld [vmem:[%s270 + $0x4] sm:$0x3]
        %v355 = vld [vmem:[%s270 + $0x6] sm:$0x3]
        %v356 = vld [vmem:[%s270 + $0x8] sm:$0x3]
        %v357 = vld [vmem:[%s270 + $0xa] sm:$0x3]
        %v358 = vld [vmem:[%s270 + $0xc] sm:$0x3]
        %v359 = vld [vmem:[%s270 + $0xe] sm:$0x3]
        %v360 = vld [vmem:[%s270 + $0x10] sm:$0x3]
        %v361 = vld [vmem:[%s270 + $0x12] sm:$0x3]
        %v362 = vld [vmem:[%s270 + $0x14] sm:$0x3]
        %v363 = vld [vmem:[%s270 + $0x16] sm:$0x3]
        %vm364 = vcmask 1041408
        %v365 = vsel %vm364, %v352, 0.0
        %v366 = vsel %vm364, %v356, 0.0
        %v367 = vadd.f32 %v365, %v366
        %v368 = vsel %vm364, %v360, 0.0
        %v369 = vadd.f32 %v367, %v368
        %v370 = vsel %vm364, %v353, 0.0
        %v371 = vsel %vm364, %v357, 0.0
        %v372 = vadd.f32 %v370, %v371
        %v373 = vsel %vm364, %v361, 0.0
        %v374 = vadd.f32 %v372, %v373
        %v375 = vsel %vm364, %v354, 0.0
        %v376 = vsel %vm364, %v358, 0.0
        %v377 = vadd.f32 %v375, %v376
        %v378 = vsel %vm364, %v362, 0.0
        %v379 = vadd.f32 %v377, %v378
        %v380 = vsel %vm364, %v355, 0.0
        %v381 = vsel %vm364, %v359, 0.0
        %v382 = vadd.f32 %v380, %v381
        %v383 = vsel %vm364, %v363, 0.0
        %v384 = vadd.f32 %v382, %v383
        %v385 = vadd.f32 %v369, 1e-07
        %v386 = vadd.f32 %v374, 1e-07
        %v387 = vadd.f32 %v379, 1e-07
        %v388 = vadd.f32 %v384, 1e-07
        %v389 = vrcp.pop %v385
        %v390 = vrcp.pop %v386
        %v391 = vrcp.pop %v387
        %v392 = vrcp.pop %v388
        %v393 = vmul.f32 %v316, %v352
        %v394 = vmul.f32 %v317, %v352
        %v395 = vmul.f32 %v318, %v352
        %v396 = vmul.f32 %v319, %v353
        %v397 = vmul.f32 %v320, %v353
        %v398 = vmul.f32 %v321, %v353
        %v399 = vmul.f32 %v322, %v354
        %v400 = vmul.f32 %v323, %v354
        %v401 = vmul.f32 %v324, %v354
        %v402 = vmul.f32 %v325, %v355
        %v403 = vmul.f32 %v326, %v355
        %v404 = vmul.f32 %v327, %v355
        %v405 = vmul.f32 %v328, %v356
        %v406 = vmul.f32 %v329, %v356
        %v407 = vmul.f32 %v330, %v356
        %v408 = vmul.f32 %v331, %v357
        %v409 = vmul.f32 %v332, %v357
        %v410 = vmul.f32 %v333, %v357
        %v411 = vmul.f32 %v334, %v358
        %v412 = vmul.f32 %v335, %v358
        %v413 = vmul.f32 %v336, %v358
        %v414 = vmul.f32 %v337, %v359
        %v415 = vmul.f32 %v338, %v359
        %v416 = vmul.f32 %v339, %v359
        %v417 = vmul.f32 %v340, %v360
        %v418 = vmul.f32 %v341, %v360
        %v419 = vmul.f32 %v342, %v360
        %v420 = vmul.f32 %v343, %v361
        %v421 = vmul.f32 %v344, %v361
        %v422 = vmul.f32 %v345, %v361
        %v423 = vmul.f32 %v346, %v362
        %v424 = vmul.f32 %v347, %v362
        %v425 = vmul.f32 %v348, %v362
        %v426 = vmul.f32 %v349, %v363
        %v427 = vmul.f32 %v350, %v363
        %v428 = vmul.f32 %v351, %v363
        %v429 = vsel %vm364, %v393, 0.0
        %v430 = vsel %vm364, %v405, 0.0
        %v431 = vadd.f32 %v429, %v430
        %v432 = vsel %vm364, %v417, 0.0
        %v433 = vadd.f32 %v431, %v432
        %v434 = vsel %vm364, %v394, 0.0
        %v435 = vsel %vm364, %v406, 0.0
        %v436 = vadd.f32 %v434, %v435
        %v437 = vsel %vm364, %v418, 0.0
        %v438 = vadd.f32 %v436, %v437
        %v439 = vsel %vm364, %v395, 0.0
        %v440 = vsel %vm364, %v407, 0.0
        %v441 = vadd.f32 %v439, %v440
        %v442 = vsel %vm364, %v419, 0.0
        %v443 = vadd.f32 %v441, %v442
        %v444 = vsel %vm364, %v396, 0.0
        %v445 = vsel %vm364, %v408, 0.0
        %v446 = vadd.f32 %v444, %v445
        %v447 = vsel %vm364, %v420, 0.0
        %v448 = vadd.f32 %v446, %v447
        %v449 = vsel %vm364, %v397, 0.0
        %v450 = vsel %vm364, %v409, 0.0
        %v451 = vadd.f32 %v449, %v450
        %v452 = vsel %vm364, %v421, 0.0
        %v453 = vadd.f32 %v451, %v452
        %v454 = vsel %vm364, %v398, 0.0
        %v455 = vsel %vm364, %v410, 0.0
        %v456 = vadd.f32 %v454, %v455
        %v457 = vsel %vm364, %v422, 0.0
        %v458 = vadd.f32 %v456, %v457
        %v459 = vsel %vm364, %v399, 0.0
        %v460 = vsel %vm364, %v411, 0.0
        %v461 = vadd.f32 %v459, %v460
        %v462 = vsel %vm364, %v423, 0.0
        %v463 = vadd.f32 %v461, %v462
        %v464 = vsel %vm364, %v400, 0.0
        %v465 = vsel %vm364, %v412, 0.0
        %v466 = vadd.f32 %v464, %v465
        %v467 = vsel %vm364, %v424, 0.0
        %v468 = vadd.f32 %v466, %v467
        %v469 = vsel %vm364, %v401, 0.0
        %v470 = vsel %vm364, %v413, 0.0
        %v471 = vadd.f32 %v469, %v470
        %v472 = vsel %vm364, %v425, 0.0
        %v473 = vadd.f32 %v471, %v472
        %v474 = vsel %vm364, %v402, 0.0
        %v475 = vsel %vm364, %v414, 0.0
        %v476 = vadd.f32 %v474, %v475
        %v477 = vsel %vm364, %v426, 0.0
        %v478 = vadd.f32 %v476, %v477
        %v479 = vsel %vm364, %v403, 0.0
        %v480 = vsel %vm364, %v415, 0.0
        %v481 = vadd.f32 %v479, %v480
        %v482 = vsel %vm364, %v427, 0.0
        %v483 = vadd.f32 %v481, %v482
        %v484 = vsel %vm364, %v404, 0.0
        %v485 = vsel %vm364, %v416, 0.0
        %v486 = vadd.f32 %v484, %v485
        %v487 = vsel %vm364, %v428, 0.0
        %v488 = vadd.f32 %v486, %v487
        %v489 = vmul.f32 %v433, %v389
        %v490 = vmul.f32 %v438, %v389
        %v491 = vmul.f32 %v443, %v389
        %v492 = vmul.f32 %v448, %v390
        %v493 = vmul.f32 %v453, %v390
        %v494 = vmul.f32 %v458, %v390
        %v495 = vmul.f32 %v463, %v391
        %v496 = vmul.f32 %v468, %v391
        %v497 = vmul.f32 %v473, %v391
        %v498 = vmul.f32 %v478, %v392
        %v499 = vmul.f32 %v483, %v392
        %v500 = vmul.f32 %v488, %v392
        %v501 = vsub.f32 %v316, %v489
        %v502 = vsub.f32 %v317, %v490
        %v503 = vsub.f32 %v318, %v491
        %v504 = vsub.f32 %v319, %v492
        %v505 = vsub.f32 %v320, %v493
        %v506 = vsub.f32 %v321, %v494
        %v507 = vsub.f32 %v322, %v495
        %v508 = vsub.f32 %v323, %v496
        %v509 = vsub.f32 %v324, %v497
        %v510 = vsub.f32 %v325, %v498
        %v511 = vsub.f32 %v326, %v499
        %v512 = vsub.f32 %v327, %v500
        %v513 = vsub.f32 %v328, %v489
        %v514 = vsub.f32 %v329, %v490
        %v515 = vsub.f32 %v330, %v491
        %v516 = vsub.f32 %v331, %v492
        %v517 = vsub.f32 %v332, %v493
        %v518 = vsub.f32 %v333, %v494
        %v519 = vsub.f32 %v334, %v495
        %v520 = vsub.f32 %v335, %v496
        %v521 = vsub.f32 %v336, %v497
        %v522 = vsub.f32 %v337, %v498
        %v523 = vsub.f32 %v338, %v499
        %v524 = vsub.f32 %v339, %v500
        %v525 = vsub.f32 %v340, %v489
        %v526 = vsub.f32 %v341, %v490
        %v527 = vsub.f32 %v342, %v491
        %v528 = vsub.f32 %v343, %v492
        %v529 = vsub.f32 %v344, %v493
        %v530 = vsub.f32 %v345, %v494
        %v531 = vsub.f32 %v346, %v495
        %v532 = vsub.f32 %v347, %v496
        %v533 = vsub.f32 %v348, %v497
        %v534 = vsub.f32 %v349, %v498
        %v535 = vsub.f32 %v350, %v499
        %v536 = vsub.f32 %v351, %v500
        %v537 = vmul.f32 %v501, %v501
        %v538 = vmul.f32 %v502, %v502
        %v539 = vmul.f32 %v503, %v503
        %v540 = vmul.f32 %v504, %v504
        %v541 = vmul.f32 %v505, %v505
        %v542 = vmul.f32 %v506, %v506
        %v543 = vmul.f32 %v507, %v507
        %v544 = vmul.f32 %v508, %v508
        %v545 = vmul.f32 %v509, %v509
        %v546 = vmul.f32 %v510, %v510
        %v547 = vmul.f32 %v511, %v511
        %v548 = vmul.f32 %v512, %v512
        %v549 = vmul.f32 %v513, %v513
        %v550 = vmul.f32 %v514, %v514
        %v551 = vmul.f32 %v515, %v515
        %v552 = vmul.f32 %v516, %v516
        %v553 = vmul.f32 %v517, %v517
        %v554 = vmul.f32 %v518, %v518
        %v555 = vmul.f32 %v519, %v519
        %v556 = vmul.f32 %v520, %v520
        %v557 = vmul.f32 %v521, %v521
        %v558 = vmul.f32 %v522, %v522
        %v559 = vmul.f32 %v523, %v523
        %v560 = vmul.f32 %v524, %v524
        %v561 = vmul.f32 %v525, %v525
        %v562 = vmul.f32 %v526, %v526
        %v563 = vmul.f32 %v527, %v527
        %v564 = vmul.f32 %v528, %v528
        %v565 = vmul.f32 %v529, %v529
        %v566 = vmul.f32 %v530, %v530
        %v567 = vmul.f32 %v531, %v531
        %v568 = vmul.f32 %v532, %v532
        %v569 = vmul.f32 %v533, %v533
        %v570 = vmul.f32 %v534, %v534
        %v571 = vmul.f32 %v535, %v535
        %v572 = vmul.f32 %v536, %v536
        %v573 = vmul.f32 %v352, %v537
        %v574 = vmul.f32 %v352, %v538
        %v575 = vmul.f32 %v352, %v539
        %v576 = vmul.f32 %v353, %v540
        %v577 = vmul.f32 %v353, %v541
        %v578 = vmul.f32 %v353, %v542
        %v579 = vmul.f32 %v354, %v543
        %v580 = vmul.f32 %v354, %v544
        %v581 = vmul.f32 %v354, %v545
        %v582 = vmul.f32 %v355, %v546
        %v583 = vmul.f32 %v355, %v547
        %v584 = vmul.f32 %v355, %v548
        %v585 = vmul.f32 %v356, %v549
        %v586 = vmul.f32 %v356, %v550
        %v587 = vmul.f32 %v356, %v551
        %v588 = vmul.f32 %v357, %v552
        %v589 = vmul.f32 %v357, %v553
        %v590 = vmul.f32 %v357, %v554
        %v591 = vmul.f32 %v358, %v555
        %v592 = vmul.f32 %v358, %v556
        %v593 = vmul.f32 %v358, %v557
        %v594 = vmul.f32 %v359, %v558
        %v595 = vmul.f32 %v359, %v559
        %v596 = vmul.f32 %v359, %v560
        %v597 = vmul.f32 %v360, %v561
        %v598 = vmul.f32 %v360, %v562
        %v599 = vmul.f32 %v360, %v563
        %v600 = vmul.f32 %v361, %v564
        %v601 = vmul.f32 %v361, %v565
        %v602 = vmul.f32 %v361, %v566
        %v603 = vmul.f32 %v362, %v567
        %v604 = vmul.f32 %v362, %v568
        %v605 = vmul.f32 %v362, %v569
        %v606 = vmul.f32 %v363, %v570
        %v607 = vmul.f32 %v363, %v571
        %v608 = vmul.f32 %v363, %v572
        %v609 = vsel %vm364, %v573, 0.0
        %v610 = vsel %vm364, %v585, 0.0
        %v611 = vadd.f32 %v609, %v610
        %v612 = vsel %vm364, %v597, 0.0
        %v613 = vadd.f32 %v611, %v612
        %v614 = vsel %vm364, %v574, 0.0
        %v615 = vsel %vm364, %v586, 0.0
        %v616 = vadd.f32 %v614, %v615
        %v617 = vsel %vm364, %v598, 0.0
        %v618 = vadd.f32 %v616, %v617
        %v619 = vsel %vm364, %v575, 0.0
        %v620 = vsel %vm364, %v587, 0.0
        %v621 = vadd.f32 %v619, %v620
        %v622 = vsel %vm364, %v599, 0.0
        %v623 = vadd.f32 %v621, %v622
        %v624 = vsel %vm364, %v576, 0.0
        %v625 = vsel %vm364, %v588, 0.0
        %v626 = vadd.f32 %v624, %v625
        %v627 = vsel %vm364, %v600, 0.0
        %v628 = vadd.f32 %v626, %v627
        %v629 = vsel %vm364, %v577, 0.0
        %v630 = vsel %vm364, %v589, 0.0
        %v631 = vadd.f32 %v629, %v630
        %v632 = vsel %vm364, %v601, 0.0
        %v633 = vadd.f32 %v631, %v632
        %v634 = vsel %vm364, %v578, 0.0
        %v635 = vsel %vm364, %v590, 0.0
        %v636 = vadd.f32 %v634, %v635
        %v637 = vsel %vm364, %v602, 0.0
        %v638 = vadd.f32 %v636, %v637
        %v639 = vsel %vm364, %v579, 0.0
        %v640 = vsel %vm364, %v591, 0.0
        %v641 = vadd.f32 %v639, %v640
        %v642 = vsel %vm364, %v603, 0.0
        %v643 = vadd.f32 %v641, %v642
        %v644 = vsel %vm364, %v580, 0.0
        %v645 = vsel %vm364, %v592, 0.0
        %v646 = vadd.f32 %v644, %v645
        %v647 = vsel %vm364, %v604, 0.0
        %v648 = vadd.f32 %v646, %v647
        %v649 = vsel %vm364, %v581, 0.0
        %v650 = vsel %vm364, %v593, 0.0
        %v651 = vadd.f32 %v649, %v650
        %v652 = vsel %vm364, %v605, 0.0
        %v653 = vadd.f32 %v651, %v652
        %v654 = vsel %vm364, %v582, 0.0
        %v655 = vsel %vm364, %v594, 0.0
        %v656 = vadd.f32 %v654, %v655
        %v657 = vsel %vm364, %v606, 0.0
        %v658 = vadd.f32 %v656, %v657
        %v659 = vsel %vm364, %v583, 0.0
        %v660 = vsel %vm364, %v595, 0.0
        %v661 = vadd.f32 %v659, %v660
        %v662 = vsel %vm364, %v607, 0.0
        %v663 = vadd.f32 %v661, %v662
        %v664 = vsel %vm364, %v584, 0.0
        %v665 = vsel %vm364, %v596, 0.0
        %v666 = vadd.f32 %v664, %v665
        %v667 = vsel %vm364, %v608, 0.0
        %v668 = vadd.f32 %v666, %v667
        %v669 = vmul.f32 %v613, %v389
        %v670 = vmul.f32 %v618, %v389
        %v671 = vmul.f32 %v623, %v389
        %v672 = vmul.f32 %v628, %v390
        %v673 = vmul.f32 %v633, %v390
        %v674 = vmul.f32 %v638, %v390
        %v675 = vmul.f32 %v643, %v391
        %v676 = vmul.f32 %v648, %v391
        %v677 = vmul.f32 %v653, %v391
        %v678 = vmul.f32 %v658, %v392
        %v679 = vmul.f32 %v663, %v392
        %v680 = vmul.f32 %v668, %v392
        %v681 = vld [vmem:[%s279] sm:$0x3]
        %v682 = vld [vmem:[%s279 + $0x2] sm:$0x3]
        %v683 = vld [vmem:[%s279 + $0x4] sm:$0x3]
        %v684 = vld [vmem:[%s279 + $0x6] sm:$0x3]
        %v685 = vld [vmem:[%s279 + $0x8] sm:$0x3]
        %v686 = vld [vmem:[%s279 + $0xa] sm:$0x3]
        %v687 = vld [vmem:[%s279 + $0xc] sm:$0x3]
        %v688 = vld [vmem:[%s279 + $0xe] sm:$0x3]
        %v689 = vld [vmem:[%s279 + $0x10] sm:$0x3]
        %v690 = vld [vmem:[%s279 + $0x12] sm:$0x3]
        %v691 = vld [vmem:[%s279 + $0x14] sm:$0x3]
        %v692 = vld [vmem:[%s279 + $0x16] sm:$0x3]
        %693 = vst [vmem:[%s311] sm:$0x3] %v681
        %694 = vst [vmem:[%s311 + $0x2] sm:$0x3] %v682
        %695 = vst [vmem:[%s311 + $0x4] sm:$0x3] %v683
        %696 = vst [vmem:[%s311 + $0x12] sm:$0x3] %v684
        %697 = vst [vmem:[%s311 + $0x14] sm:$0x3] %v685
        %698 = vst [vmem:[%s311 + $0x16] sm:$0x3] %v686
        %699 = vst [vmem:[%s311 + $0x24] sm:$0x3] %v687
        %700 = vst [vmem:[%s311 + $0x26] sm:$0x3] %v688
        %701 = vst [vmem:[%s311 + $0x28] sm:$0x3] %v689
        %702 = vst [vmem:[%s311 + $0x36] sm:$0x3] %v690
        %703 = vst [vmem:[%s311 + $0x38] sm:$0x3] %v691
        %704 = vst [vmem:[%s311 + $0x3a] sm:$0x3] %v692
        %s705 = scalar_lea.vmem %s311, 6 [#allocation8]
        %706 = vst [vmem:[%s705] sm:$0x3] %v489
        %707 = vst [vmem:[%s705 + $0x2] sm:$0x3] %v490
        %708 = vst [vmem:[%s705 + $0x4] sm:$0x3] %v491
        %709 = vst [vmem:[%s705 + $0x12] sm:$0x3] %v492
        %710 = vst [vmem:[%s705 + $0x14] sm:$0x3] %v493
        %711 = vst [vmem:[%s705 + $0x16] sm:$0x3] %v494
        %712 = vst [vmem:[%s705 + $0x24] sm:$0x3] %v495
        %713 = vst [vmem:[%s705 + $0x26] sm:$0x3] %v496
        %714 = vst [vmem:[%s705 + $0x28] sm:$0x3] %v497
        %715 = vst [vmem:[%s705 + $0x36] sm:$0x3] %v498
        %716 = vst [vmem:[%s705 + $0x38] sm:$0x3] %v499
        %717 = vst [vmem:[%s705 + $0x3a] sm:$0x3] %v500
        %s718 = scalar_lea.vmem %s311, 12 [#allocation8]
        %719 = vst [vmem:[%s718] sm:$0x3] %v669
        %720 = vst [vmem:[%s718 + $0x2] sm:$0x3] %v670
        %721 = vst [vmem:[%s718 + $0x4] sm:$0x3] %v671
        %722 = vst [vmem:[%s718 + $0x12] sm:$0x3] %v672
        %723 = vst [vmem:[%s718 + $0x14] sm:$0x3] %v673
        %724 = vst [vmem:[%s718 + $0x16] sm:$0x3] %v674
        %725 = vst [vmem:[%s718 + $0x24] sm:$0x3] %v675
        %726 = vst [vmem:[%s718 + $0x26] sm:$0x3] %v676
        %727 = vst [vmem:[%s718 + $0x28] sm:$0x3] %v677
        %728 = vst [vmem:[%s718 + $0x36] sm:$0x3] %v678
        %729 = vst [vmem:[%s718 + $0x38] sm:$0x3] %v679
        %730 = vst [vmem:[%s718 + $0x3a] sm:$0x3] %v680
        %s731 = sand.u32 %s144, 1
        %s732 = scalar_lea.sflag [#allocation4], %s731
        %s733 = sand.u32 %s144, 1
        %s734 = smul.addr %s733, 72
        %s735 = scalar_lea.vmem [#allocation8], %s734
        // Predicated region
        $region45: #{tpu_custom_call.1} parent=31 // pred_check
          %p736 = pneg %p154
        $region46: #{tpu_custom_call.1} parent=31 // pred_check_branch
          %738 = sbr.rel (%p736) target = $region48
        $region47: #{tpu_custom_call.1} parent=31 // pred_region
          %s739 = smul.u32 4, %s29
          %s741 = ssub.s32 1152, 1152
          %742 = vsyncadd %s732, %s741
          %s743 = smul.addr %s739, 9
          %s744 = sadd.s32 %s30, %s743
          %s745 = smul.addr %s28, 36
          %s746 = sadd.s32 %s744, %s745
          %s747 = smul.addr %s746, 32
          %s748 = scalar_lea.hbm %s3, %s747
          %s749 = sshll.u32 %s735, 4
          %s750 = int_to_ptr.vmem [resolvable:$true] %s749
          %755 = dma.vmem_to_hbm [thread:$0]  %s750, 1152, %s748, %s732, 32, 32, 2
        $region48: #{tpu_custom_call.1} parent=31 // pred_fallthru
          _
      $region32: #{tpu_custom_call.1} parent=5 // pred_fallthru
        _
      %p756 = scmp.le.s32.totalorder 2, %s18
      // Predicated region
      $region49: #{tpu_custom_call.1} parent=5 // pred_check
        %p757 = pneg %p756
      $region50: #{tpu_custom_call.1} parent=5 // pred_check_branch
        %759 = sbr.rel (%p757) target = $region52
      $region51: #{tpu_custom_call.1} parent=5 // pred_region
        %s760 = ssub.s32 %s18, 2
        // Predicated region
        $region53: #{tpu_custom_call.1} parent=51 // pred_check
          %p761 = pneg %p160
        $region54: #{tpu_custom_call.1} parent=51 // pred_check_branch
          %763 = sbr.rel (%p761) target = $region56
        $region55: #{tpu_custom_call.1} parent=51 // pred_region
          %s764 = sand.u32 %s145, 1
          %s765 = scalar_lea.sflag [#allocation4], %s764
          %s766 = sand.u32 %s145, 1
          %s767 = smul.addr %s766, 72
          %s768 = scalar_lea.vmem [#allocation8], %s767
          %769 = dma.done %s765, 1152
        $region56: #{tpu_custom_call.1} parent=51 // pred_fallthru
          _
      $region52: #{tpu_custom_call.1} parent=5 // pred_fallthru
        _
    $region6: #{tpu_custom_call.1} parent=1 // loop_footer
      %s22 = sadd.s32 1, %s18
    $region7: #{tpu_custom_call.1} parent=1 // loop_footer_branch
      %17 = sbr.rel target = $region3
    $region8: #{tpu_custom_call.1} parent=1 // loop_exit
      _
    %770 = vsyncpa [#allocation3], 1
    %s771 = scalar_lea.sflag [#allocation3], 1
    %772 = vsyncpa %s771, 1
    %773 = vsyncpa [#allocation6], 1
    %s774 = scalar_lea.sflag [#allocation6], 1
    %775 = vsyncpa %s774, 1
    %776 = vsyncpa [#allocation4], 1
    %s777 = scalar_lea.sflag [#allocation4], 1
    %778 = vsyncpa %s777, 1

</llo_original>
